<compile_context>
chip_gen: v7x
topology: tpu7x:2x2x1
jax: 0.10.0
libtpu: 0.0.40
codegen_flags: <defaults>
</compile_context>

<pallas_src>
import functools

import jax
import jax.numpy as jnp
from jax.experimental import pallas as pl
from jax.experimental.pallas import tpu as pltpu

LANES = 128                            # vreg lane width (last dim)
TARGET_BLOCK_BYTES = 2 * 1024 * 1024   # ~2 MiB input block per grid step


def _ganloss_kernel(x_ref, out_ref, acc_ref, *, n_valid, label, gan_mode, tm, steps):
    """Streaming elementwise loss + vreg-resident partial sum.

    Grid = (num_cores, steps): leading axis is "parallel" (splits across the two
    TensorCores on v7x, runs serially elsewhere); trailing axis streams tiles.

    x_ref   : VMEM tile (tm, LANES) of logits/preds (original dtype)
    out_ref : VMEM (1, 1) f32 per-core partial sum
    acc_ref : VMEM (8, LANES) (or (1, LANES)) f32 accumulator, persists across s
    """
    p = pl.program_id(0)
    s = pl.program_id(1)

    @pl.when(s == 0)
    def _init():
        acc_ref[...] = jnp.zeros_like(acc_ref)

    x = x_ref[...].astype(jnp.float32)

    def loss_fn(v):
        if gan_mode == "vanilla":
            # Numerically stable BCEWithLogits.
            soft = jnp.log1p(jnp.exp(-jnp.abs(v)))      # EUP (exp + log)
            if label == 1.0:
                return jnp.maximum(-v, 0.0) + soft      # max(x,0)-x == relu(-x)
            if label == 0.0:
                return jnp.maximum(v, 0.0) + soft
            return jnp.maximum(v, 0.0) - v * jnp.float32(label) + soft
        # lsgan
        d = v - jnp.float32(label)
        return d * d

    def reduce_rows(per):
        # Fold (tm, LANES) into the accumulator using only leading-axis (VPU)
        # vreg adds when tm % 8 == 0; the single XLU reduce happens in finalize.
        if acc_ref.shape[0] == 8:
            return per.reshape(tm // 8, 8, LANES).sum(axis=0)
        return per.sum(axis=0, keepdims=True)

    tile_elems = tm * LANES
    tile_idx = p * steps + s                           # unclamped global tile index
    needs_mask = (tile_idx + 1) * tile_elems > n_valid

    @pl.when(jnp.logical_not(needs_mask))
    def _acc_full():
        acc_ref[...] += reduce_rows(loss_fn(x))

    @pl.when(needs_mask)
    def _acc_masked():
        row = jax.lax.broadcasted_iota(jnp.int32, (tm, LANES), 0)
        col = jax.lax.broadcasted_iota(jnp.int32, (tm, LANES), 1)
        gidx = (tile_idx * tm + row) * LANES + col
        valid = gidx < n_valid
        # Zero invalid lanes *before* the transcendentals, then mask the result.
        per = loss_fn(jnp.where(valid, x, 0.0))
        acc_ref[...] += reduce_rows(jnp.where(valid, per, 0.0))

    @pl.when(s == pl.num_programs(1) - 1)
    def _finalize():
        out_ref[...] = jnp.sum(acc_ref[...], keepdims=True)


@functools.partial(jax.jit, static_argnames=("label", "gan_mode"))
def _gan_loss_jit(preds, *, label, gan_mode):
    x = preds.reshape(-1)                 # keep original dtype for the HBM->VMEM DMA
    n = int(x.shape[0])

    # Pad only a <=127-element ragged tail (no-op for lane-aligned logits).
    rem = n % LANES
    if rem:
        x = jnp.pad(x, (0, LANES - rem))
    rows = x.shape[0] // LANES
    x = x.reshape(rows, LANES)

    itemsize = jnp.dtype(x.dtype).itemsize
    # ~2 MiB input block (double-buffered -> ~4 MiB), a multiple of 8 sublanes.
    tm_max = max(8, (TARGET_BLOCK_BYTES // (LANES * itemsize)) // 8 * 8)
    tm = rows if rows <= tm_max else tm_max   # small input: one full-extent block
    num_tiles = pl.cdiv(rows, tm)

    # v7x: split tile range over the 2 TensorCores; serial (harmless) on v5e/v6e.
    num_cores = 2 if num_tiles >= 2 else 1
    steps = pl.cdiv(num_tiles, num_cores)

    acc_rows = 8 if tm % 8 == 0 else 1        # single-vreg accumulator when possible

    kernel = functools.partial(_ganloss_kernel, n_valid=n, label=label,
                               gan_mode=gan_mode, tm=tm, steps=steps)

    cost = pl.CostEstimate(
        flops=5 * n if gan_mode == "vanilla" else 3 * n,
        transcendentals=2 * n if gan_mode == "vanilla" else 0,
        bytes_accessed=n * itemsize + num_cores * 4,
    )

    partials = pl.pallas_call(
        kernel,
        out_shape=jax.ShapeDtypeStruct((num_cores, 1), jnp.float32),
        grid=(num_cores, steps),
        in_specs=[pl.BlockSpec(
            (tm, LANES),
            # Clamp so an odd tile count never DMAs out of bounds; the phantom
            # tile's contribution is zeroed by the gidx >= n_valid mask.
            lambda p, s: (jnp.minimum(p * steps + s, num_tiles - 1), 0))],
        out_specs=pl.BlockSpec((1, 1), lambda p, s: (p, 0)),
        scratch_shapes=[pltpu.VMEM((acc_rows, LANES), jnp.float32)],
        compiler_params=pltpu.CompilerParams(
            dimension_semantics=("parallel", "arbitrary"),
            vmem_limit_bytes=32 * 1024 * 1024),
        cost_estimate=cost,
    )(x)

    # Sum the (tiny) per-core partials and take the mean.
    return jnp.sum(partials) * jnp.float32(1.0 / n)


def gan_loss(preds, target_is_real, gan_mode="vanilla",
             real_label=1.0, fake_label=0.0):
    """Pallas equivalent of GANLoss.forward(preds, target_is_real) -> scalar mean loss."""
    if gan_mode not in ("vanilla", "lsgan"):
        raise ValueError(f"unsupported gan_mode: {gan_mode}")
    label = float(real_label if target_is_real else fake_label)
    return _gan_loss_jit(preds, label=label, gan_mode=gan_mode)


def _reference_gan_loss(preds, target_is_real, gan_mode="vanilla",
                        real_label=1.0, fake_label=0.0):
    """Pure-JAX reference matching PyTorch BCEWithLogitsLoss / MSELoss (mean)."""
    x = preds.astype(jnp.float32)
    y = jnp.float32(real_label if target_is_real else fake_label)
    if gan_mode == "vanilla":
        per = jnp.maximum(x, 0.0) - x * y + jnp.log1p(jnp.exp(-jnp.abs(x)))
    elif gan_mode == "lsgan":
        per = (x - y) ** 2
    else:
        raise ValueError(gan_mode)
    return jnp.mean(per)


if __name__ == "__main__":
    key = jax.random.PRNGKey(0)
    k1, k2, k3 = jax.random.split(key, 3)

    # Patch-discriminator logits, NCHW (lane-aligned: 2*1*16*16 = 512 = 4*128).
    preds = jax.random.normal(k1, (2, 1, 16, 16), dtype=jnp.float32)
    # Ragged case (numel not a multiple of 128) exercising the masked tail.
    preds_ragged = jax.random.normal(k2, (2, 1, 15, 15), dtype=jnp.float32)
    # Multi-tile case: 3*4096*128 - 77 elems -> 3 tiles of tm=4096, 2-core grid
    # with one clamped phantom tile and a ragged final tile.
    preds_multi = jax.random.normal(k3, (3 * 4096 * 128 - 77,), dtype=jnp.float32)

    checks = [
        (preds, True, "vanilla"),
        (preds, False, "vanilla"),
        (preds, True, "lsgan"),
        (preds_ragged, False, "vanilla"),
        (preds_multi, True, "vanilla"),
        (preds_multi, False, "lsgan"),
    ]
    results = [gan_loss(p, target_is_real=r, gan_mode=m) for (p, r, m) in checks]
    jax.block_until_ready(results)

    for (p, r, m), got in zip(checks, results):
        ref = _reference_gan_loss(p, r, m)
        tol = 1e-4 if p.size > 100_000 else 1e-5
        assert jnp.allclose(got, ref, atol=tol, rtol=tol), (m, r, got, ref)

    # bf16 preds stream as bf16 over HBM->VMEM and are cast to f32 in-kernel.
    preds_bf16 = preds.astype(jnp.bfloat16)
    got_bf16 = gan_loss(preds_bf16, target_is_real=True, gan_mode="vanilla")
    jax.block_until_ready(got_bf16)
    ref_bf16 = _reference_gan_loss(preds_bf16, True, "vanilla")
    assert jnp.allclose(got_bf16, ref_bf16, atol=1e-4, rtol=1e-4), (got_bf16, ref_bf16)

    print("KERNEL_OK")
</pallas_src>

<mosaic_0001>
module attributes {stable_mosaic.version = 11 : i64} {
  func.func @_ganloss_kernel(%arg0: i32, %arg1: i32, %arg2: memref<4x128xf32, #tpu.memory_space<vmem>>, %arg3: memref<1x1xf32, #tpu.memory_space<vmem>>, %arg4: memref<1x128xf32, #tpu.memory_space<vmem>>) attributes {dimension_semantics = [#tpu.dimension_semantics<parallel>, #tpu.dimension_semantics<arbitrary>], iteration_bounds = array<i64: 1, 1>, scalar_prefetch = 0 : i64, scratch_operands = 1 : i64, tpu.core_type = #tpu.core_type<tc>, window_params = [{transform_indices = @transform_0, window_bounds = array<i64: 4, 128>}, {transform_indices = @transform_1, window_bounds = array<i64: 1, 1>}]} {
    %c0_i32 = arith.constant 0 : i32
    %0 = arith.cmpi eq, %arg1, %c0_i32 : i32
    %1 = arith.extui %0 : i1 to i32
    %c0_i32_0 = arith.constant 0 : i32
    %2 = arith.cmpi ne, %1, %c0_i32_0 : i32
    scf.if %2 {
      %cst = arith.constant 0.000000e+00 : f32
      %17 = vector.broadcast %cst : f32 to vector<1x128xf32>
      %c0_8 = arith.constant 0 : index
      %c0_9 = arith.constant 0 : index
      %18 = vector.load %arg4[%c0_8, %c0_9] : memref<1x128xf32, #tpu.memory_space<vmem>>, vector<1x128xf32>
      tpu.vector_store %arg4[%c0_8, %c0_9], %17 {strides = array<i32>} : memref<1x128xf32, #tpu.memory_space<vmem>>, vector<1x128xf32>,
    } else {
    }
    %c0 = arith.constant 0 : index
    %c0_1 = arith.constant 0 : index
    %3 = vector.load %arg2[%c0, %c0_1] : memref<4x128xf32, #tpu.memory_space<vmem>>, vector<4x128xf32>
    %c1_i32 = arith.constant 1 : i32
    %4 = arith.muli %arg0, %c1_i32 : i32
    %5 = arith.addi %4, %arg1 : i32
    %c1_i32_2 = arith.constant 1 : i32
    %6 = arith.addi %5, %c1_i32_2 : i32
    %c512_i32 = arith.constant 512 : i32
    %7 = arith.muli %6, %c512_i32 : i32
    %c512_i32_3 = arith.constant 512 : i32
    %8 = arith.cmpi sgt, %7, %c512_i32_3 : i32
    %true = arith.constant true
    %9 = arith.xori %8, %true : i1
    %10 = arith.extui %9 : i1 to i32
    %c0_i32_4 = arith.constant 0 : i32
    %11 = arith.cmpi ne, %10, %c0_i32_4 : i32
    scf.if %11 {
      %c0_8 = arith.constant 0 : index
      %c0_9 = arith.constant 0 : index
      %17 = vector.load %arg4[%c0_8, %c0_9] : memref<1x128xf32, #tpu.memory_space<vmem>>, vector<1x128xf32>
      %18 = math.absf %3 : vector<4x128xf32>
      %cst = arith.constant 0.000000e+00 : f32
      %19 = vector.broadcast %cst : f32 to vector<4x128xf32>
      %20 = arith.subf %19, %18 : vector<4x128xf32>
      %21 = math.exp %20 : vector<4x128xf32>
      %22 = math.log1p %21 : vector<4x128xf32>
      %cst_10 = arith.constant 0.000000e+00 : f32
      %23 = vector.broadcast %cst_10 : f32 to vector<4x128xf32>
      %24 = arith.subf %23, %3 : vector<4x128xf32>
      %cst_11 = arith.constant 0.000000e+00 : f32
      %25 = vector.broadcast %cst_11 : f32 to vector<4x128xf32>
      %26 = arith.maximumf %24, %25 : vector<4x128xf32>
      %27 = arith.addf %26, %22 : vector<4x128xf32>
      %cst_12 = arith.constant dense<0.000000e+00> : vector<128xf32>
      %28 = vector.multi_reduction <add>, %27, %cst_12 [0] : vector<4x128xf32> to vector<128xf32>
      %29 = vector.shape_cast %28 : vector<128xf32> to vector<1x128xf32>
      %30 = arith.addf %17, %29 : vector<1x128xf32>
      %c0_13 = arith.constant 0 : index
      %c0_14 = arith.constant 0 : index
      %31 = vector.load %arg4[%c0_13, %c0_14] : memref<1x128xf32, #tpu.memory_space<vmem>>, vector<1x128xf32>
      tpu.vector_store %arg4[%c0_13, %c0_14], %30 {strides = array<i32>} : memref<1x128xf32, #tpu.memory_space<vmem>>, vector<1x128xf32>,
    } else {
    }
    %12 = arith.extui %8 : i1 to i32
    %c0_i32_5 = arith.constant 0 : i32
    %13 = arith.cmpi ne, %12, %c0_i32_5 : i32
    scf.if %13 {
      %17 = tpu.iota {dimensions = array<i32: 0>} : vector<4x128xi32>
      %18 = tpu.iota {dimensions = array<i32: 1>} : vector<4x128xi32>
      %c4_i32 = arith.constant 4 : i32
      %19 = arith.muli %5, %c4_i32 : i32
      %20 = vector.broadcast %19 : i32 to vector<4x128xi32>
      %21 = arith.addi %20, %17 : vector<4x128xi32>
      %c128_i32 = arith.constant 128 : i32
      %22 = vector.broadcast %c128_i32 : i32 to vector<4x128xi32>
      %23 = arith.muli %21, %22 : vector<4x128xi32>
      %24 = arith.addi %23, %18 : vector<4x128xi32>
      %c512_i32_8 = arith.constant 512 : i32
      %25 = vector.broadcast %c512_i32_8 : i32 to vector<4x128xi32>
      %26 = arith.cmpi slt, %24, %25 : vector<4x128xi32>
      %cst = arith.constant 0.000000e+00 : f32
      %27 = vector.broadcast %cst : f32 to vector<4x128xf32>
      %28 = arith.select %26, %3, %27 : vector<4x128xi1>, vector<4x128xf32>
      %29 = math.absf %28 : vector<4x128xf32>
      %cst_9 = arith.constant 0.000000e+00 : f32
      %30 = vector.broadcast %cst_9 : f32 to vector<4x128xf32>
      %31 = arith.subf %30, %29 : vector<4x128xf32>
      %32 = math.exp %31 : vector<4x128xf32>
      %33 = math.log1p %32 : vector<4x128xf32>
      %cst_10 = arith.constant 0.000000e+00 : f32
      %34 = vector.broadcast %cst_10 : f32 to vector<4x128xf32>
      %35 = arith.subf %34, %28 : vector<4x128xf32>
      %cst_11 = arith.constant 0.000000e+00 : f32
      %36 = vector.broadcast %cst_11 : f32 to vector<4x128xf32>
      %37 = arith.maximumf %35, %36 : vector<4x128xf32>
      %38 = arith.addf %37, %33 : vector<4x128xf32>
      %c0_12 = arith.constant 0 : index
      %c0_13 = arith.constant 0 : index
      %39 = vector.load %arg4[%c0_12, %c0_13] : memref<1x128xf32, #tpu.memory_space<vmem>>, vector<1x128xf32>
      %cst_14 = arith.constant 0.000000e+00 : f32
      %40 = vector.broadcast %cst_14 : f32 to vector<4x128xf32>
      %41 = arith.select %26, %38, %40 : vector<4x128xi1>, vector<4x128xf32>
      %cst_15 = arith.constant dense<0.000000e+00> : vector<128xf32>
      %42 = vector.multi_reduction <add>, %41, %cst_15 [0] : vector<4x128xf32> to vector<128xf32>
      %43 = vector.shape_cast %42 : vector<128xf32> to vector<1x128xf32>
      %44 = arith.addf %39, %43 : vector<1x128xf32>
      %c0_16 = arith.constant 0 : index
      %c0_17 = arith.constant 0 : index
      %45 = vector.load %arg4[%c0_16, %c0_17] : memref<1x128xf32, #tpu.memory_space<vmem>>, vector<1x128xf32>
      tpu.vector_store %arg4[%c0_16, %c0_17], %44 {strides = array<i32>} : memref<1x128xf32, #tpu.memory_space<vmem>>, vector<1x128xf32>,
    } else {
    }
    %c0_i32_6 = arith.constant 0 : i32
    %14 = arith.cmpi eq, %arg1, %c0_i32_6 : i32
    %15 = arith.extui %14 : i1 to i32
    %c0_i32_7 = arith.constant 0 : i32
    %16 = arith.cmpi ne, %15, %c0_i32_7 : i32
    scf.if %16 {
      %c0_8 = arith.constant 0 : index
      %c0_9 = arith.constant 0 : index
      %17 = vector.load %arg4[%c0_8, %c0_9] : memref<1x128xf32, #tpu.memory_space<vmem>>, vector<1x128xf32>
      %18 = vector.shape_cast %17 : vector<1x128xf32> to vector<1x1x128xf32>
      %cst = arith.constant dense<0.000000e+00> : vector<1xf32>
      %19 = vector.multi_reduction <add>, %18, %cst [1, 2] : vector<1x1x128xf32> to vector<1xf32>
      %20 = vector.shape_cast %19 : vector<1xf32> to vector<1x1x1xf32>
      %21 = vector.extract %20[0, 0, 0] : f32 from vector<1x1x1xf32>
      %22 = vector.broadcast %21 : f32 to vector<1x1xf32>
      %c0_10 = arith.constant 0 : index
      %c0_11 = arith.constant 0 : index
      %23 = vector.load %arg3[%c0_10, %c0_11] : memref<1x1xf32, #tpu.memory_space<vmem>>, vector<1x1xf32>
      tpu.vector_store %arg3[%c0_10, %c0_11], %22 {strides = array<i32>} : memref<1x1xf32, #tpu.memory_space<vmem>>, vector<1x1xf32>,
    } else {
    }
    return
  }
  func.func @transform_0(%arg0: i32, %arg1: i32) -> (i32, i32) {
    %c1_i32 = arith.constant 1 : i32
    %0 = arith.muli %arg0, %c1_i32 : i32
    %1 = arith.addi %0, %arg1 : i32
    %c0_i32 = arith.constant 0 : i32
    %2 = arith.minsi %1, %c0_i32 : i32
    %c0_i32_0 = arith.constant 0 : i32
    %c0_i32_1 = arith.constant 0 : i32
    return %2, %c0_i32_0 : i32, i32
  }
  func.func @transform_1(%arg0: i32, %arg1: i32) -> (i32, i32) {
    %c0_i32 = arith.constant 0 : i32
    %c0_i32_0 = arith.constant 0 : i32
    return %arg0, %c0_i32 : i32, i32
  }
}

</mosaic_0001>

<llo_original>
// kernel: _gan_loss_jit.1
$region0: #{_gan_loss_jit.1}
  #allocation0 [shape = 'u32[]', space=smem, size = 0x4, offset = 0x4, fixed_abs, tag = 'smem constant byte address 0x4 - core index']
  #allocation1 [shape = 'u32[144,128]{1,0:T(1,128)}', space=vmem, size = 0x12000, scoped, tag = 'internal scratch']
  #allocation2 [shape = 'f32[1,128]{1,0:T(1,128)}', space=vmem, size = 0x200, scoped, tag = 'scratch operand']
  %s0 = inlined_call_operand.vmem [shape: f32[4,128], index: 0, kind: input, shape index: {}]
  %s1 = inlined_call_operand.hbm [shape: f32[1,1], index: 1, kind: output, shape index: {}]
  %s2 = sld [smem:[#allocation0]]
  $region30: #{_gan_loss_jit.1} parent=0
    _
  %s4 = ssub.s32 1, %s2
  %s5 = scalar_select 0, %s4, %s2
  $region1: #{_gan_loss_jit.1} parent=0
    #allocation3 [shape = 'u8[512]{0}', space=vmem, size = 0x400, scoped, tag = 'output window, operand 0, single buffered']
    #allocation4 [shape = 's32[1]{0}', space=sflag, size = 0x4, scoped, tag = 'scoped memory for _gan_loss_jit.1']
    %6 = vsyncpa [#allocation4], 0
    // Predicated region
    $region2: #{_gan_loss_jit.1} parent=1 // pred_check
      _
    $region3: #{_gan_loss_jit.1} parent=1 // pred_check_branch
      %8 = sbr.rel (0) target = $region5
    $region4: #{_gan_loss_jit.1} parent=1 // pred_region
      %s9 = sadd.s32 0, 0
      %p10 = scmp.lt.s32.totalorder %s9, 0
      %s11 = scalar_select %p10, %s9, 0
      %p12 = scmp.lt.s32.totalorder %s11, 0
      %s13 = scalar_select %p12, %s11, 0
      %s14 = smul.addr %s13, 4
      %s15 = scalar_lea.vmem %s0, %s14
      %s16 = sadd.s32 0, 0
      %p17 = scmp.lt.s32.totalorder %s16, 0
      %s18 = scalar_select %p17, %s16, 0
    $region5: #{_gan_loss_jit.1} parent=1 // pred_fallthru
      _
    %s19 = sadd.s32 0, 0
    %p20 = scmp.lt.s32.totalorder %s19, 0
    %s21 = scalar_select %p20, %s19, 0
    %p22 = scmp.lt.s32.totalorder %s21, 0
    %s23 = scalar_select %p22, %s21, 0
    %s24 = smul.addr %s23, 4
    %s25 = scalar_lea.vmem %s0, %s24
    %s26 = sadd.s32 0, 0
    %p27 = scmp.lt.s32.totalorder %s26, 0
    %s28 = scalar_select %p27, %s26, 0
    %p29 = scmp.lt.s32.totalorder %s28, 0
    %s30 = scalar_select %p29, %s28, 0
    %s31 = smul.addr %s30, 4
    %s32 = scalar_lea.vmem %s0, %s31
    %s33 = sadd.s32 0, 0
    %p34 = scmp.lt.s32.totalorder %s33, 0
    %s35 = scalar_select %p34, %s33, 0
    %p36 = scmp.eq.s32.totalorder 0, 0
    // Predicated region
    $region6: #{_gan_loss_jit.1} parent=1 // pred_check
      %p37 = pneg %p36
    $region7: #{_gan_loss_jit.1} parent=1 // pred_check_branch
      %39 = sbr.rel (%p37) target = $region9
    $region8: #{_gan_loss_jit.1} parent=1 // pred_region
      %40 = vst [vmem:[#allocation2] sm:$0x1] 0.0
    $region9: #{_gan_loss_jit.1} parent=1 // pred_fallthru
      _
    %v41 = vld [vmem:[%s32] sm:$0xf]
    %s42 = sadd.s32 0, 0
    %s43 = sadd.s32 %s42, 1
    %s44 = smul.u32 %s43, 512
    %p45 = scmp.gt.s32.totalorder %s44, 512
    %p46 = scmp.le.s32.totalorder %s44, 512
    // Predicated region
    $region10: #{_gan_loss_jit.1} parent=1 // pred_check
      %p47 = pneg %p46
    $region11: #{_gan_loss_jit.1} parent=1 // pred_check_branch
      %49 = sbr.rel (%p47) target = $region13
    $region12: #{_gan_loss_jit.1} parent=1 // pred_region
      %v50 = vld [vmem:[#allocation2] sm:$0x1]
      %v51 = vand.u32 2147483647, %v41
      %v52 = vsub.f32 0.0, %v51
      %v53 = vmul.f32 %v52, 1.442695
      %v54 = vpow.pop %v53
      %v55 = vadd.f32 %v54, 1.0
      %v56 = vlog2.pop %v55
      %v57 = vmul.f32 %v56, 0.6931472
      %v58 = vmul.f32 -0.5, %v54
      %v59 = vadd.f32 %v58, 1.0
      %v60 = vmul.f32 %v59, %v54
      %v61 = vand.u32 2147483647, %v54
      %vm62 = vcmp.lt.f32.partialorder %v61, 0.0004427343
      %v63 = vsel %vm62, %v60, %v57
      %v64 = vsub.f32 0.0, %v41
      %v65 = vmax.f32 %v64, 0.0
      %v66 = vadd.f32 %v65, %v63
      %vm67 = vcmask 1043456
      %v68 = vsel %vm67, %v66, 0.0
      %v69 = vrot.slane %v68, 4
      %v70 = vadd.f32 %v68, %v69
      %v71 = vrot.slane %v70, 2
      %v72 = vadd.f32 %v70, %v71
      %v73 = vrot.slane %v72, 1
      %v74 = vadd.f32 %v72, %v73
      %v75 = vadd.f32 %v50, %v74
      %76 = vst [vmem:[#allocation2] sm:$0x1] %v75
    $region13: #{_gan_loss_jit.1} parent=1 // pred_fallthru
      _
    // Predicated region
    $region14: #{_gan_loss_jit.1} parent=1 // pred_check
      %p77 = pneg %p45
    $region15: #{_gan_loss_jit.1} parent=1 // pred_check_branch
      %79 = sbr.rel (%p77) target = $region17
    $region16: #{_gan_loss_jit.1} parent=1 // pred_region
      %v80 = vlaneseq
      %v81 = vshrl.u32 %v80, 7
      %v82 = vlaneseq
      %v83 = vand.u32 %v82, 127
      %s84 = smul.u32 %s42, 4
      %v85 = vstv %s84
      %v86 = vadd.s32 %v85, %v81
      %v87 = vmul.u32 %v86, 128
      %v88 = vadd.s32 %v87, %v83
      %vm89 = vcmp.lt.s32.totalorder %v88, 512
      %v90 = vsel %vm89, %v41, 0.0
      %v91 = vand.u32 2147483647, %v90
      %v92 = vsub.f32 0.0, %v91
      %v93 = vmul.f32 %v92, 1.442695
      %v94 = vpow.pop %v93
      %v95 = vadd.f32 %v94, 1.0
      %v96 = vlog2.pop %v95
      %v97 = vmul.f32 %v96, 0.6931472
      %v98 = vmul.f32 -0.5, %v94
      %v99 = vadd.f32 %v98, 1.0
      %v100 = vmul.f32 %v99, %v94
      %v101 = vand.u32 2147483647, %v94
      %vm102 = vcmp.lt.f32.partialorder %v101, 0.0004427343
      %v103 = vsel %vm102, %v100, %v97
      %v104 = vsub.f32 0.0, %v90
      %v105 = vmax.f32 %v104, 0.0
      %v106 = vadd.f32 %v105, %v103
      %v107 = vld [vmem:[#allocation2] sm:$0x1]
      %v108 = vsel %vm89, %v106, 0.0
      %vm109 = vcmask 1043456
      %v110 = vsel %vm109, %v108, 0.0
      %v111 = vrot.slane %v110, 4
      %v112 = vadd.f32 %v110, %v111
      %v113 = vrot.slane %v112, 2
      %v114 = vadd.f32 %v112, %v113
      %v115 = vrot.slane %v114, 1
      %v116 = vadd.f32 %v114, %v115
      %v117 = vadd.f32 %v107, %v116
      %118 = vst [vmem:[#allocation2] sm:$0x1] %v117
    $region17: #{_gan_loss_jit.1} parent=1 // pred_fallthru
      _
    // Predicated region
    $region18: #{_gan_loss_jit.1} parent=1 // pred_check
      %p119 = pneg %p36
    $region19: #{_gan_loss_jit.1} parent=1 // pred_check_branch
      %121 = sbr.rel (%p119) target = $region21
    $region20: #{_gan_loss_jit.1} parent=1 // pred_region
      %v122 = vld [vmem:[#allocation2] sm:$0x1]
      %vm123 = vcmask 1040384
      %v124 = vsel %vm123, %v122, 0.0
      %125 = vadd.xlane.f32.xlu0 %v124
      %v126 = vpop.xlane.xlu0 %125
      %v127 = vrot.slane %v126, 4
      %v128 = vadd.f32 %v126, %v127
      %v129 = vrot.slane %v128, 2
      %v130 = vadd.f32 %v128, %v129
      %v131 = vrot.slane %v130, 1
      %v132 = vadd.f32 %v130, %v131
      %s133 = vtos %v132
      %v134 = vstv %s133
      %vm135 = vcmask 0
      %136 = vst.msk [vmem:[#allocation3] sm:$0x1] %vm135, %v134
    $region21: #{_gan_loss_jit.1} parent=1 // pred_fallthru
      _
    // Predicated region
    $region22: #{_gan_loss_jit.1} parent=1 // pred_check
      _
    $region23: #{_gan_loss_jit.1} parent=1 // pred_check_branch
      %138 = sbr.rel (0) target = $region25
    $region24: #{_gan_loss_jit.1} parent=1 // pred_region
      %s140 = ssub.s32 16, 16
      %141 = vsyncadd [#allocation4], %s140
      %s143 = sshll.u32 [#allocation3], 4
      %s144 = int_to_ptr.vmem [resolvable:$true] %s143
      %146 = dma.vmem_to_hbm [thread:$0]  %s144, 16, %s1, [#allocation4]
    $region25: #{_gan_loss_jit.1} parent=1 // pred_fallthru
      _
    // Predicated region
    $region26: #{_gan_loss_jit.1} parent=1 // pred_check
      _
    $region27: #{_gan_loss_jit.1} parent=1 // pred_check_branch
      %148 = sbr.rel (0) target = $region29
    $region28: #{_gan_loss_jit.1} parent=1 // pred_region
      %149 = dma.done [#allocation4], 16
    $region29: #{_gan_loss_jit.1} parent=1 // pred_fallthru
      _
    %150 = vsyncpa [#allocation4], 1

</llo_original>
